<compile_context>
chip_gen: v6e
topology: v6e:2x2x1
jax: 0.10.0
libtpu: 0.0.40
codegen_flags: <defaults>
</compile_context>

<pallas_src>
import functools

import jax
import jax.numpy as jnp
from jax.experimental import pallas as pl
from jax.experimental.pallas import tpu as pltpu

_LANES = 128
_SMALL_BYTES = 128 << 10  # below this, fused-XLA jnp is already optimal


# --------------------------------------------------------------------------
# Kernel body
# --------------------------------------------------------------------------
def _grelu_kernel(x_ref, o_ref, *, leak, max_, sub):
    x = x_ref[...]
    # Trace-time (Python) branching on static hyperparameters, mirroring the
    # PyTorch module's truthiness checks.
    if leak:
        y = jnp.where(x >= 0, x, x * jnp.asarray(leak, x.dtype))  # leaky_relu
    else:
        y = jnp.maximum(x, jnp.asarray(0, x.dtype))               # relu
    if sub:
        y = y - jnp.asarray(sub, x.dtype)
    # PyTorch does `if self.max: clamp(max=self.max)`. Clamping at +inf is a
    # true no-op, so skip emitting it.
    if max_ and max_ != float("inf"):
        y = jnp.minimum(y, jnp.asarray(max_, x.dtype))
    o_ref[...] = y


def _grelu_jnp(x, leak, max_, sub):
    """Same trace-time-pruned math, plain jnp (small tensors / ragged tail)."""
    if leak:
        y = jnp.where(x >= 0, x, x * jnp.asarray(leak, x.dtype))
    else:
        y = jnp.maximum(x, jnp.asarray(0, x.dtype))
    if sub:
        y = y - jnp.asarray(sub, x.dtype)
    if max_ and max_ != float("inf"):
        y = jnp.minimum(y, jnp.asarray(max_, x.dtype))
    return y


# --------------------------------------------------------------------------
# Tiling / sizing helpers
# --------------------------------------------------------------------------
def _row_unit(dtype):
    """Sublane packing unit: 8 for 4-byte, 16 for 2-byte, 32 for 1-byte dtypes."""
    itemsize = jnp.dtype(dtype).itemsize
    return {4: 8, 2: 16, 1: 32}.get(itemsize, 8)


def _tpu_sizing():
    """Return (target_block_bytes, vmem_limit_bytes), generation-aware."""
    vmem_cap = 64 << 20  # conservative default: v7x per-TC VMEM
    try:
        info = pltpu.get_tpu_info()
        cap = int(getattr(info, "vmem_capacity_bytes", 0) or 0)
        if cap > 0:
            vmem_cap = cap
    except Exception:
        pass
    if vmem_cap <= (64 << 20):
        # v7x-class: ~3.2 TB/s HBM per TC -> bigger blocks keep the fixed
        # ~0.35 us/step overhead hidden. 2 arrays x 2 buffers x 8 MiB = 32 MiB
        # live, inside a 40 MiB limit with headroom under 64 MiB physical.
        return 8 << 20, 40 << 20
    # v5e / v6e: 128 MiB VMEM, ~0.8-1.4 TB/s HBM; 4 MiB blocks sit on the
    # measured ~86%-of-roofline plateau, 48 MiB limit never constrains buffering.
    return 4 << 20, 48 << 20


def _tile_rows(rows, lanes, itemsize, row_unit, target_block_bytes):
    total_bytes = rows * lanes * itemsize
    # Never a single block: >= 2 blocks keeps input-DMA / compute / output
    # writeback pipelined and gives both v7x TensorCores work.
    num_blocks = max(2, pl.cdiv(total_bytes, target_block_bytes))
    tr = pl.cdiv(rows, num_blocks)
    tr = ((tr + row_unit - 1) // row_unit) * row_unit  # dtype-aligned rows
    tr = max(row_unit, min(tr, rows))                  # keep block shape legal
    return tr


# --------------------------------------------------------------------------
# Pallas launcher on a lane-dense (rows, 128) slab
# --------------------------------------------------------------------------
def _run_2d(x2d, *, leak, max_, sub):
    rows, lanes = x2d.shape
    dtype = x2d.dtype
    itemsize = jnp.dtype(dtype).itemsize
    row_unit = _row_unit(dtype)

    target_block_bytes, vmem_limit = _tpu_sizing()
    tr = _tile_rows(rows, lanes, itemsize, row_unit, target_block_bytes)
    grid = (pl.cdiv(rows, tr),)

    kernel = functools.partial(_grelu_kernel, leak=leak, max_=max_, sub=sub)

    # NOTE(perf): if an xprof trace ever shows exposed DMA at block
    # boundaries, add pipeline_mode=pl.Buffered(3) on the input BlockSpec.
    # input_output_aliases={0: 0} is intentionally omitted: without caller-side
    # donation it would force XLA to insert a defensive copy.
    return pl.pallas_call(
        kernel,
        out_shape=jax.ShapeDtypeStruct((rows, lanes), dtype),
        grid_spec=pltpu.PrefetchScalarGridSpec(
            num_scalar_prefetch=0,
            grid=grid,
            in_specs=[pl.BlockSpec((tr, lanes), lambda i: (i, 0))],
            out_specs=pl.BlockSpec((tr, lanes), lambda i: (i, 0)),
        ),
        compiler_params=pltpu.CompilerParams(
            # TODO(synk): if xprof shows one idle TensorCore on v7x, switch
            # this axis to pltpu.CORE_PARALLEL (needs on-hardware verification).
            dimension_semantics=("parallel",),
            vmem_limit_bytes=int(vmem_limit),
        ),
    )(x2d)


# --------------------------------------------------------------------------
# Public wrapper: any shape, any float dtype
# --------------------------------------------------------------------------
def grelu(x, leak=0.0, max=float("inf"), sub=0.0):
    """Apply GRelu elementwise via a Pallas TPU kernel."""
    orig_shape = x.shape
    max_ = max  # avoid builtin-shadowing confusion

    n = 1
    for d in orig_shape:
        n *= int(d)
    if n == 0:
        return x  # empty tensor: nothing to do

    itemsize = jnp.dtype(x.dtype).itemsize
    if n * itemsize < _SMALL_BYTES:
        # Tiny activations: pallas launch overhead dominates; fused XLA is
        # already at roofline here.
        return _grelu_jnp(x, leak, max_, sub)

    flat = x.reshape(-1)
    n_prefix = (n // _LANES) * _LANES

    if n_prefix == n:
        # Fast path: exact lane-dense reshape, no padding, no final slice.
        rows = n // _LANES
        out2d = _run_2d(flat.reshape(rows, _LANES), leak=leak, max_=max_, sub=sub)
        return out2d.reshape(orig_shape)

    # Ragged element count: Pallas on the lane-aligned prefix, plain jnp on
    # the (< 128-element) tail — no full-input pad + full-output slice.
    rows = n_prefix // _LANES
    prefix_out = _run_2d(
        flat[:n_prefix].reshape(rows, _LANES), leak=leak, max_=max_, sub=sub
    )
    tail_out = _grelu_jnp(flat[n_prefix:], leak, max_, sub)
    return jnp.concatenate([prefix_out.reshape(-1), tail_out]).reshape(orig_shape)


def grelu_reference(x, leak=0.0, max=float("inf"), sub=0.0):
    """Pure-JAX reference matching the PyTorch forward."""
    if leak:
        y = jnp.where(x >= 0, x, x * leak)
    else:
        y = jnp.maximum(x, 0)
    if sub:
        y = y - sub
    if max:
        y = jnp.minimum(y, max)
    return y.astype(x.dtype)


# --------------------------------------------------------------------------
# Self-test
# --------------------------------------------------------------------------
if __name__ == "__main__":
    root = jax.random.PRNGKey(0)
    k0, k1, k2, k3, k4 = jax.random.split(root, 5)

    # 1) Canonical small NCHW activation, default GRelu() (plain ReLU).
    #    Small -> routed to the jnp fast path by design.
    x = jax.random.normal(k0, (2, 4, 16, 16), dtype=jnp.float32)
    y = jax.block_until_ready(grelu(x))
    assert jnp.allclose(y, grelu_reference(x), atol=1e-6), "default GRelu mismatch"

    # 2) Same shape, non-trivial configuration (leaky + sub + clamp).
    y2 = jax.block_until_ready(grelu(x, leak=0.1, max=2.0, sub=0.4))
    assert jnp.allclose(
        y2, grelu_reference(x, leak=0.1, max=2.0, sub=0.4), atol=1e-6
    ), "configured GRelu mismatch"

    # 3) Mid-size activation (512 KiB) -> Pallas path, 2 pipelined blocks.
    xm = jax.random.normal(k1, (2, 4, 128, 128), dtype=jnp.float32)
    ym = jax.block_until_ready(grelu(xm, leak=0.1, max=2.0, sub=0.4))
    assert jnp.allclose(
        ym, grelu_reference(xm, leak=0.1, max=2.0, sub=0.4), atol=1e-6
    ), "mid-size GRelu mismatch"

    # 4) Larger activation (16 MiB) -> Pallas path, multiple target-size blocks.
    xl = jax.random.normal(k2, (8, 8, 256, 256), dtype=jnp.float32)
    yl = jax.block_until_ready(grelu(xl, leak=0.2))
    assert jnp.allclose(yl, grelu_reference(xl, leak=0.2), atol=1e-6), (
        "large GRelu mismatch"
    )

    # 5) Ragged element count (not a multiple of 128) above the small cutoff:
    #    aligned prefix via Pallas, tiny tail via jnp.
    xr = jax.random.normal(k3, (3, 217, 217), dtype=jnp.float32)
    yr = jax.block_until_ready(grelu(xr, leak=0.2, max=1.5, sub=0.1))
    assert jnp.allclose(
        yr, grelu_reference(xr, leak=0.2, max=1.5, sub=0.1), atol=1e-6
    ), "ragged GRelu mismatch"

    # 6) bf16 exercises the dtype-aware row unit (16 sublanes) on the Pallas path.
    xb = jax.random.normal(k4, (2, 4, 128, 128), dtype=jnp.bfloat16)
    yb = jax.block_until_ready(grelu(xb, leak=0.1, max=2.0, sub=0.4))
    yb_ref = grelu_reference(xb, leak=0.1, max=2.0, sub=0.4)
    assert jnp.allclose(
        yb.astype(jnp.float32), yb_ref.astype(jnp.float32), atol=1e-2
    ), "bf16 GRelu mismatch"

    print("KERNEL_OK")
</pallas_src>

<mosaic_0001>
module attributes {stable_mosaic.version = 11 : i64} {
  func.func @_grelu_kernel(%arg0: i32, %arg1: memref<512x128xf32, #tpu.memory_space<vmem>>, %arg2: memref<512x128xf32, #tpu.memory_space<vmem>>) attributes {dimension_semantics = [#tpu.dimension_semantics<parallel>], iteration_bounds = array<i64: 2>, scalar_prefetch = 0 : i64, scratch_operands = 0 : i64, tpu.core_type = #tpu.core_type<tc>, window_params = [{transform_indices = @transform_0, window_bounds = array<i64: 512, 128>}, {transform_indices = @transform_1, window_bounds = array<i64: 512, 128>}]} {
    %c0 = arith.constant 0 : index
    %c0_0 = arith.constant 0 : index
    %0 = vector.load %arg1[%c0, %c0_0] : memref<512x128xf32, #tpu.memory_space<vmem>>, vector<512x128xf32>
    %cst = arith.constant 0.000000e+00 : f32
    %1 = vector.broadcast %cst : f32 to vector<512x128xf32>
    %2 = arith.cmpf oge, %0, %1 : vector<512x128xf32>
    %cst_1 = arith.constant 1.000000e-01 : f32
    %3 = vector.broadcast %cst_1 : f32 to vector<512x128xf32>
    %4 = arith.mulf %0, %3 : vector<512x128xf32>
    %5 = arith.select %2, %0, %4 : vector<512x128xi1>, vector<512x128xf32>
    %cst_2 = arith.constant 4.000000e-01 : f32
    %6 = vector.broadcast %cst_2 : f32 to vector<512x128xf32>
    %7 = arith.subf %5, %6 : vector<512x128xf32>
    %cst_3 = arith.constant 2.000000e+00 : f32
    %8 = vector.broadcast %cst_3 : f32 to vector<512x128xf32>
    %9 = arith.minimumf %7, %8 : vector<512x128xf32>
    %c0_4 = arith.constant 0 : index
    %c0_5 = arith.constant 0 : index
    %10 = vector.load %arg2[%c0_4, %c0_5] : memref<512x128xf32, #tpu.memory_space<vmem>>, vector<512x128xf32>
    tpu.vector_store %arg2[%c0_4, %c0_5], %9 {strides = array<i32>} : memref<512x128xf32, #tpu.memory_space<vmem>>, vector<512x128xf32>,
    return
  }
  func.func @transform_0(%arg0: i32) -> (i32, i32) {
    %c0_i32 = arith.constant 0 : i32
    %c0_i32_0 = arith.constant 0 : i32
    return %arg0, %c0_i32 : i32, i32
  }
  func.func @transform_1(%arg0: i32) -> (i32, i32) {
    %c0_i32 = arith.constant 0 : i32
    %c0_i32_0 = arith.constant 0 : i32
    return %arg0, %c0_i32 : i32, i32
  }
}

</mosaic_0001>

<llo_original>
// kernel: tpu_custom_call.1
$region0: #{tpu_custom_call.1}
  #allocation0 [shape = 'u32[]', space=smem, size = 0x4, offset = 0x4, fixed_abs, tag = 'smem constant byte address 0x4 - core index']
  #allocation1 [shape = 'u32[144,128]{1,0:T(1,128)}', space=vmem, size = 0x12000, scoped, tag = 'internal scratch']
  %s0 = inlined_call_operand.hbm [shape: f32[1024,128], index: 0, kind: input, shape index: {}]
  %s1 = inlined_call_operand.hbm [shape: f32[1024,128], index: 1, kind: output, shape index: {}]
  %s2 = sld [smem:[#allocation0]]
  $region41: #{tpu_custom_call.1} parent=0
    _
  %s4 = ssub.s32 1, %s2
  %s5 = scalar_select 0, %s4, %s2
  $region1: #{tpu_custom_call.1} parent=0
    #allocation2 [shape = 'u8[524288]{0}', space=vmem, size = 0x80000, scoped, tag = 'input window, operand 0']
    #allocation3 [shape = 's32[2]{0}', space=sflag, size = 0x8, scoped, tag = 'scoped memory for tpu_custom_call.1']
    #allocation4 [shape = 's32[2]{0}', space=sflag, size = 0x8, scoped, tag = 'scoped memory for tpu_custom_call.1']
    #allocation5 [shape = 'u8[524288]{0}', space=vmem, size = 0x80000, scoped, tag = 'output window, operand 0']
    %6 = vsyncpa [#allocation3], 0
    %s7 = scalar_lea.sflag [#allocation3], 1
    %8 = vsyncpa %s7, 0
    %9 = vsyncpa [#allocation4], 0
    %s10 = scalar_lea.sflag [#allocation4], 1
    %11 = vsyncpa %s10, 0
    loop: start=0, step=1, limit=4
    $region2: #{tpu_custom_call.1} parent=1 // loop_pre_header
      _
    $region3: #{tpu_custom_call.1} parent=1 // loop_header
      %s13 = sphi 0, %s17
      %p14 = scmp.ge.s32.totalorder %s13, 4
      %s23 = sphi 0, %s25
      %s26 = sphi 0, %s23
      %s27 = sphi 0, %s26
      %s43 = sphi 0, %s27
      %s49 = sphi 0, %s51
      %s52 = sphi 0, %s49
      %s53 = sphi 0, %s52
      %s69 = sphi 0, %s53
    $region4: #{tpu_custom_call.1} parent=1 // loop_header_branch
      %16 = sbr.rel (%p14) target = $region8
    $region5: #{tpu_custom_call.1} parent=1 // loop_body
      %s18 = ssub.s32 %s13, 1
      %s19 = ssub.s32 %s13, 2
      %s20 = sadd.s32 %s13, 1
      %s21 = ssub.s32 %s13, %s20
      %p22 = scmp.eq.s32.totalorder %s21, 0
      %s24 = sadd.s32 %s23, 1
      %s25 = scalar_select %p22, %s23, %s24
      %p28 = pneg %p22
      %p29 = scmp.eq.s32.totalorder %s13, 1
      %p30 = por %p28, %p29
      %p31 = scmp.ne.s32.totalorder %s23, %s26
      %p32 = scmp.eq.s32.totalorder %s13, 0
      %p33 = por %p31, %p32
      %p34 = scmp.ne.s32.totalorder %s23, %s26
      %p35 = scmp.eq.s32.totalorder %s18, 1
      %p36 = por %p34, %p35
      %p37 = scmp.ne.s32.totalorder %s26, %s27
      %p38 = scmp.eq.s32.totalorder %s18, 0
      %p39 = por %p37, %p38
      %p40 = scmp.ne.s32.totalorder %s26, %s27
      %p41 = scmp.eq.s32.totalorder %s19, 1
      %p42 = por %p40, %p41
      %p44 = scmp.ne.s32.totalorder %s27, %s43
      %p45 = scmp.eq.s32.totalorder %s19, 0
      %p46 = por %p44, %p45
      %s47 = ssub.s32 %s13, %s20
      %p48 = scmp.eq.s32.totalorder %s47, 0
      %s50 = sadd.s32 %s49, 1
      %s51 = scalar_select %p48, %s49, %s50
      %p54 = pneg %p48
      %p55 = scmp.eq.s32.totalorder %s13, 1
      %p56 = por %p54, %p55
      %p57 = scmp.ne.s32.totalorder %s49, %s52
      %p58 = scmp.eq.s32.totalorder %s13, 0
      %p59 = por %p57, %p58
      %p60 = scmp.ne.s32.totalorder %s49, %s52
      %p61 = scmp.eq.s32.totalorder %s18, 1
      %p62 = por %p60, %p61
      %p63 = scmp.ne.s32.totalorder %s52, %s53
      %p64 = scmp.eq.s32.totalorder %s18, 0
      %p65 = por %p63, %p64
      %p66 = scmp.ne.s32.totalorder %s52, %s53
      %p67 = scmp.eq.s32.totalorder %s19, 1
      %p68 = por %p66, %p67
      %p70 = scmp.ne.s32.totalorder %s53, %s69
      %p71 = scmp.eq.s32.totalorder %s19, 0
      %p72 = por %p70, %p71
      %p73 = scmp.le.s32.totalorder 1, %s13
      %p74 = scmp.lt.s32.totalorder %s13, 3
      %p75 = pnand %p73, %p74
      %p76 = pneg %p75
      // Predicated region
      $region9: #{tpu_custom_call.1} parent=5 // pred_check
        _
      $region10: #{tpu_custom_call.1} parent=5 // pred_check_branch
        %78 = sbr.rel (%p75) target = $region12
      $region11: #{tpu_custom_call.1} parent=5 // pred_region
        %s79 = ssub.s32 %s13, 1
      $region12: #{tpu_custom_call.1} parent=5 // pred_fallthru
        _
      %p80 = scmp.lt.s32.totalorder %s13, 2
      // Predicated region
      $region13: #{tpu_custom_call.1} parent=5 // pred_check
        %p81 = pneg %p80
      $region14: #{tpu_custom_call.1} parent=5 // pred_check_branch
        %83 = sbr.rel (%p81) target = $region16
      $region15: #{tpu_custom_call.1} parent=5 // pred_region
        // Predicated region
        $region17: #{tpu_custom_call.1} parent=15 // pred_check
          %p84 = pneg %p33
        $region18: #{tpu_custom_call.1} parent=15 // pred_check_branch
          %86 = sbr.rel (%p84) target = $region20
        $region19: #{tpu_custom_call.1} parent=15 // pred_region
          %s87 = sand.u32 %s23, 1
          %s88 = scalar_lea.sflag [#allocation3], %s87
          %s89 = sand.u32 %s23, 1
          %s90 = smul.addr %s89, 512
          %s91 = scalar_lea.vmem [#allocation2], %s90
          %s92 = smul.u32 64, %s13
          %s94 = ssub.s32 8192, 8192
          %95 = vsyncadd %s88, %s94
          %s96 = smul.addr %s92, 128
          %s97 = scalar_lea.hbm %s0, %s96
          %s98 = sshll.u32 %s91, 4
          %s99 = int_to_ptr.vmem [resolvable:$true] %s98
          %104 = dma.hbm_to_vmem [thread:$0]  %s97, 8192, %s99, %s88, 128, 128, 8
        $region20: #{tpu_custom_call.1} parent=15 // pred_fallthru
          _
      $region16: #{tpu_custom_call.1} parent=5 // pred_fallthru
        _
      %p105 = scmp.le.s32.totalorder 1, %s13
      %p106 = scmp.lt.s32.totalorder %s13, 3
      %p107 = pnand %p105, %p106
      %p108 = pneg %p107
      // Predicated region
      $region21: #{tpu_custom_call.1} parent=5 // pred_check
        _
      $region22: #{tpu_custom_call.1} parent=5 // pred_check_branch
        %110 = sbr.rel (%p107) target = $region24
      $region23: #{tpu_custom_call.1} parent=5 // pred_region
        %s111 = ssub.s32 %s13, 1
        %s112 = sand.u32 %s26, 1
        %s113 = scalar_lea.sflag [#allocation3], %s112
        %s114 = sand.u32 %s26, 1
        %s115 = smul.addr %s114, 512
        %s116 = scalar_lea.vmem [#allocation2], %s115
        // Predicated region
        $region25: #{tpu_custom_call.1} parent=23 // pred_check
          %p117 = pneg %p39
        $region26: #{tpu_custom_call.1} parent=23 // pred_check_branch
          %119 = sbr.rel (%p117) target = $region28
        $region27: #{tpu_custom_call.1} parent=23 // pred_region
          %120 = dma.done %s113, 8192
        $region28: #{tpu_custom_call.1} parent=23 // pred_fallthru
          _
        %s121 = sand.u32 %s26, 1
        %s122 = scalar_lea.sflag [#allocation3], %s121
        %s123 = sand.u32 %s26, 1
        %s124 = smul.addr %s123, 512
        %s125 = scalar_lea.vmem [#allocation2], %s124
        %p126 = pneg %p39
        %p127 = pneg %p36
        %p128 = pneg %p65
        %p129 = pneg %p62
        %s130 = sand.u32 %s52, 1
        %s131 = scalar_lea.sflag [#allocation4], %s130
        %s132 = sand.u32 %s52, 1
        %s133 = smul.addr %s132, 512
        %s134 = scalar_lea.vmem [#allocation5], %s133
        %s135 = smul.u32 64, %s18
        %s136 = smul.u32 64, %s18
        %v137 = vld [vmem:[%s116] sm:$0xff]
        %v138 = vld [vmem:[%s116 + $0x8] sm:$0xff]
        %v139 = vld [vmem:[%s116 + $0x10] sm:$0xff]
        %v140 = vld [vmem:[%s116 + $0x18] sm:$0xff]
        %v141 = vld [vmem:[%s116 + $0x20] sm:$0xff]
        %v142 = vld [vmem:[%s116 + $0x28] sm:$0xff]
        %v143 = vld [vmem:[%s116 + $0x30] sm:$0xff]
        %v144 = vld [vmem:[%s116 + $0x38] sm:$0xff]
        %v145 = vld [vmem:[%s116 + $0x40] sm:$0xff]
        %v146 = vld [vmem:[%s116 + $0x48] sm:$0xff]
        %v147 = vld [vmem:[%s116 + $0x50] sm:$0xff]
        %v148 = vld [vmem:[%s116 + $0x58] sm:$0xff]
        %v149 = vld [vmem:[%s116 + $0x60] sm:$0xff]
        %v150 = vld [vmem:[%s116 + $0x68] sm:$0xff]
        %v151 = vld [vmem:[%s116 + $0x70] sm:$0xff]
        %v152 = vld [vmem:[%s116 + $0x78] sm:$0xff]
        %v153 = vld [vmem:[%s116 + $0x80] sm:$0xff]
        %v154 = vld [vmem:[%s116 + $0x88] sm:$0xff]
        %v155 = vld [vmem:[%s116 + $0x90] sm:$0xff]
        %v156 = vld [vmem:[%s116 + $0x98] sm:$0xff]
        %v157 = vld [vmem:[%s116 + $0xa0] sm:$0xff]
        %v158 = vld [vmem:[%s116 + $0xa8] sm:$0xff]
        %v159 = vld [vmem:[%s116 + $0xb0] sm:$0xff]
        %v160 = vld [vmem:[%s116 + $0xb8] sm:$0xff]
        %v161 = vld [vmem:[%s116 + $0xc0] sm:$0xff]
        %v162 = vld [vmem:[%s116 + $0xc8] sm:$0xff]
        %v163 = vld [vmem:[%s116 + $0xd0] sm:$0xff]
        %v164 = vld [vmem:[%s116 + $0xd8] sm:$0xff]
        %v165 = vld [vmem:[%s116 + $0xe0] sm:$0xff]
        %v166 = vld [vmem:[%s116 + $0xe8] sm:$0xff]
        %v167 = vld [vmem:[%s116 + $0xf0] sm:$0xff]
        %v168 = vld [vmem:[%s116 + $0xf8] sm:$0xff]
        %v169 = vld [vmem:[%s116 + $0x100] sm:$0xff]
        %v170 = vld [vmem:[%s116 + $0x108] sm:$0xff]
        %v171 = vld [vmem:[%s116 + $0x110] sm:$0xff]
        %v172 = vld [vmem:[%s116 + $0x118] sm:$0xff]
        %v173 = vld [vmem:[%s116 + $0x120] sm:$0xff]
        %v174 = vld [vmem:[%s116 + $0x128] sm:$0xff]
        %v175 = vld [vmem:[%s116 + $0x130] sm:$0xff]
        %v176 = vld [vmem:[%s116 + $0x138] sm:$0xff]
        %v177 = vld [vmem:[%s116 + $0x140] sm:$0xff]
        %v178 = vld [vmem:[%s116 + $0x148] sm:$0xff]
        %v179 = vld [vmem:[%s116 + $0x150] sm:$0xff]
        %v180 = vld [vmem:[%s116 + $0x158] sm:$0xff]
        %v181 = vld [vmem:[%s116 + $0x160] sm:$0xff]
        %v182 = vld [vmem:[%s116 + $0x168] sm:$0xff]
        %v183 = vld [vmem:[%s116 + $0x170] sm:$0xff]
        %v184 = vld [vmem:[%s116 + $0x178] sm:$0xff]
        %v185 = vld [vmem:[%s116 + $0x180] sm:$0xff]
        %v186 = vld [vmem:[%s116 + $0x188] sm:$0xff]
        %v187 = vld [vmem:[%s116 + $0x190] sm:$0xff]
        %v188 = vld [vmem:[%s116 + $0x198] sm:$0xff]
        %v189 = vld [vmem:[%s116 + $0x1a0] sm:$0xff]
        %v190 = vld [vmem:[%s116 + $0x1a8] sm:$0xff]
        %v191 = vld [vmem:[%s116 + $0x1b0] sm:$0xff]
        %v192 = vld [vmem:[%s116 + $0x1b8] sm:$0xff]
        %v193 = vld [vmem:[%s116 + $0x1c0] sm:$0xff]
        %v194 = vld [vmem:[%s116 + $0x1c8] sm:$0xff]
        %v195 = vld [vmem:[%s116 + $0x1d0] sm:$0xff]
        %v196 = vld [vmem:[%s116 + $0x1d8] sm:$0xff]
        %v197 = vld [vmem:[%s116 + $0x1e0] sm:$0xff]
        %v198 = vld [vmem:[%s116 + $0x1e8] sm:$0xff]
        %v199 = vld [vmem:[%s116 + $0x1f0] sm:$0xff]
        %v200 = vld [vmem:[%s116 + $0x1f8] sm:$0xff]
        %vm201 = vcmp.ge.f32.partialorder %v137, 0.0
        %vm202 = vcmp.ge.f32.partialorder %v138, 0.0
        %vm203 = vcmp.ge.f32.partialorder %v139, 0.0
        %vm204 = vcmp.ge.f32.partialorder %v140, 0.0
        %vm205 = vcmp.ge.f32.partialorder %v141, 0.0
        %vm206 = vcmp.ge.f32.partialorder %v142, 0.0
        %vm207 = vcmp.ge.f32.partialorder %v143, 0.0
        %vm208 = vcmp.ge.f32.partialorder %v144, 0.0
        %vm209 = vcmp.ge.f32.partialorder %v145, 0.0
        %vm210 = vcmp.ge.f32.partialorder %v146, 0.0
        %vm211 = vcmp.ge.f32.partialorder %v147, 0.0
        %vm212 = vcmp.ge.f32.partialorder %v148, 0.0
        %vm213 = vcmp.ge.f32.partialorder %v149, 0.0
        %vm214 = vcmp.ge.f32.partialorder %v150, 0.0
        %vm215 = vcmp.ge.f32.partialorder %v151, 0.0
        %vm216 = vcmp.ge.f32.partialorder %v152, 0.0
        %vm217 = vcmp.ge.f32.partialorder %v153, 0.0
        %vm218 = vcmp.ge.f32.partialorder %v154, 0.0
        %vm219 = vcmp.ge.f32.partialorder %v155, 0.0
        %vm220 = vcmp.ge.f32.partialorder %v156, 0.0
        %vm221 = vcmp.ge.f32.partialorder %v157, 0.0
        %vm222 = vcmp.ge.f32.partialorder %v158, 0.0
        %vm223 = vcmp.ge.f32.partialorder %v159, 0.0
        %vm224 = vcmp.ge.f32.partialorder %v160, 0.0
        %vm225 = vcmp.ge.f32.partialorder %v161, 0.0
        %vm226 = vcmp.ge.f32.partialorder %v162, 0.0
        %vm227 = vcmp.ge.f32.partialorder %v163, 0.0
        %vm228 = vcmp.ge.f32.partialorder %v164, 0.0
        %vm229 = vcmp.ge.f32.partialorder %v165, 0.0
        %vm230 = vcmp.ge.f32.partialorder %v166, 0.0
        %vm231 = vcmp.ge.f32.partialorder %v167, 0.0
        %vm232 = vcmp.ge.f32.partialorder %v168, 0.0
        %vm233 = vcmp.ge.f32.partialorder %v169, 0.0
        %vm234 = vcmp.ge.f32.partialorder %v170, 0.0
        %vm235 = vcmp.ge.f32.partialorder %v171, 0.0
        %vm236 = vcmp.ge.f32.partialorder %v172, 0.0
        %vm237 = vcmp.ge.f32.partialorder %v173, 0.0
        %vm238 = vcmp.ge.f32.partialorder %v174, 0.0
        %vm239 = vcmp.ge.f32.partialorder %v175, 0.0
        %vm240 = vcmp.ge.f32.partialorder %v176, 0.0
        %vm241 = vcmp.ge.f32.partialorder %v177, 0.0
        %vm242 = vcmp.ge.f32.partialorder %v178, 0.0
        %vm243 = vcmp.ge.f32.partialorder %v179, 0.0
        %vm244 = vcmp.ge.f32.partialorder %v180, 0.0
        %vm245 = vcmp.ge.f32.partialorder %v181, 0.0
        %vm246 = vcmp.ge.f32.partialorder %v182, 0.0
        %vm247 = vcmp.ge.f32.partialorder %v183, 0.0
        %vm248 = vcmp.ge.f32.partialorder %v184, 0.0
        %vm249 = vcmp.ge.f32.partialorder %v185, 0.0
        %vm250 = vcmp.ge.f32.partialorder %v186, 0.0
        %vm251 = vcmp.ge.f32.partialorder %v187, 0.0
        %vm252 = vcmp.ge.f32.partialorder %v188, 0.0
        %vm253 = vcmp.ge.f32.partialorder %v189, 0.0
        %vm254 = vcmp.ge.f32.partialorder %v190, 0.0
        %vm255 = vcmp.ge.f32.partialorder %v191, 0.0
        %vm256 = vcmp.ge.f32.partialorder %v192, 0.0
        %vm257 = vcmp.ge.f32.partialorder %v193, 0.0
        %vm258 = vcmp.ge.f32.partialorder %v194, 0.0
        %vm259 = vcmp.ge.f32.partialorder %v195, 0.0
        %vm260 = vcmp.ge.f32.partialorder %v196, 0.0
        %vm261 = vcmp.ge.f32.partialorder %v197, 0.0
        %vm262 = vcmp.ge.f32.partialorder %v198, 0.0
        %vm263 = vcmp.ge.f32.partialorder %v199, 0.0
        %vm264 = vcmp.ge.f32.partialorder %v200, 0.0
        %v265 = vmul.f32 %v137, 0.1
        %v266 = vmul.f32 %v138, 0.1
        %v267 = vmul.f32 %v139, 0.1
        %v268 = vmul.f32 %v140, 0.1
        %v269 = vmul.f32 %v141, 0.1
        %v270 = vmul.f32 %v142, 0.1
        %v271 = vmul.f32 %v143, 0.1
        %v272 = vmul.f32 %v144, 0.1
        %v273 = vmul.f32 %v145, 0.1
        %v274 = vmul.f32 %v146, 0.1
        %v275 = vmul.f32 %v147, 0.1
        %v276 = vmul.f32 %v148, 0.1
        %v277 = vmul.f32 %v149, 0.1
        %v278 = vmul.f32 %v150, 0.1
        %v279 = vmul.f32 %v151, 0.1
        %v280 = vmul.f32 %v152, 0.1
        %v281 = vmul.f32 %v153, 0.1
        %v282 = vmul.f32 %v154, 0.1
        %v283 = vmul.f32 %v155, 0.1
        %v284 = vmul.f32 %v156, 0.1
        %v285 = vmul.f32 %v157, 0.1
        %v286 = vmul.f32 %v158, 0.1
        %v287 = vmul.f32 %v159, 0.1
        %v288 = vmul.f32 %v160, 0.1
        %v289 = vmul.f32 %v161, 0.1
        %v290 = vmul.f32 %v162, 0.1
        %v291 = vmul.f32 %v163, 0.1
        %v292 = vmul.f32 %v164, 0.1
        %v293 = vmul.f32 %v165, 0.1
        %v294 = vmul.f32 %v166, 0.1
        %v295 = vmul.f32 %v167, 0.1
        %v296 = vmul.f32 %v168, 0.1
        %v297 = vmul.f32 %v169, 0.1
        %v298 = vmul.f32 %v170, 0.1
        %v299 = vmul.f32 %v171, 0.1
        %v300 = vmul.f32 %v172, 0.1
        %v301 = vmul.f32 %v173, 0.1
        %v302 = vmul.f32 %v174, 0.1
        %v303 = vmul.f32 %v175, 0.1
        %v304 = vmul.f32 %v176, 0.1
        %v305 = vmul.f32 %v177, 0.1
        %v306 = vmul.f32 %v178, 0.1
        %v307 = vmul.f32 %v179, 0.1
        %v308 = vmul.f32 %v180, 0.1
        %v309 = vmul.f32 %v181, 0.1
        %v310 = vmul.f32 %v182, 0.1
        %v311 = vmul.f32 %v183, 0.1
        %v312 = vmul.f32 %v184, 0.1
        %v313 = vmul.f32 %v185, 0.1
        %v314 = vmul.f32 %v186, 0.1
        %v315 = vmul.f32 %v187, 0.1
        %v316 = vmul.f32 %v188, 0.1
        %v317 = vmul.f32 %v189, 0.1
        %v318 = vmul.f32 %v190, 0.1
        %v319 = vmul.f32 %v191, 0.1
        %v320 = vmul.f32 %v192, 0.1
        %v321 = vmul.f32 %v193, 0.1
        %v322 = vmul.f32 %v194, 0.1
        %v323 = vmul.f32 %v195, 0.1
        %v324 = vmul.f32 %v196, 0.1
        %v325 = vmul.f32 %v197, 0.1
        %v326 = vmul.f32 %v198, 0.1
        %v327 = vmul.f32 %v199, 0.1
        %v328 = vmul.f32 %v200, 0.1
        %v329 = vsel %vm201, %v137, %v265
        %v330 = vsel %vm202, %v138, %v266
        %v331 = vsel %vm203, %v139, %v267
        %v332 = vsel %vm204, %v140, %v268
        %v333 = vsel %vm205, %v141, %v269
        %v334 = vsel %vm206, %v142, %v270
        %v335 = vsel %vm207, %v143, %v271
        %v336 = vsel %vm208, %v144, %v272
        %v337 = vsel %vm209, %v145, %v273
        %v338 = vsel %vm210, %v146, %v274
        %v339 = vsel %vm211, %v147, %v275
        %v340 = vsel %vm212, %v148, %v276
        %v341 = vsel %vm213, %v149, %v277
        %v342 = vsel %vm214, %v150, %v278
        %v343 = vsel %vm215, %v151, %v279
        %v344 = vsel %vm216, %v152, %v280
        %v345 = vsel %vm217, %v153, %v281
        %v346 = vsel %vm218, %v154, %v282
        %v347 = vsel %vm219, %v155, %v283
        %v348 = vsel %vm220, %v156, %v284
        %v349 = vsel %vm221, %v157, %v285
        %v350 = vsel %vm222, %v158, %v286
        %v351 = vsel %vm223, %v159, %v287
        %v352 = vsel %vm224, %v160, %v288
        %v353 = vsel %vm225, %v161, %v289
        %v354 = vsel %vm226, %v162, %v290
        %v355 = vsel %vm227, %v163, %v291
        %v356 = vsel %vm228, %v164, %v292
        %v357 = vsel %vm229, %v165, %v293
        %v358 = vsel %vm230, %v166, %v294
        %v359 = vsel %vm231, %v167, %v295
        %v360 = vsel %vm232, %v168, %v296
        %v361 = vsel %vm233, %v169, %v297
        %v362 = vsel %vm234, %v170, %v298
        %v363 = vsel %vm235, %v171, %v299
        %v364 = vsel %vm236, %v172, %v300
        %v365 = vsel %vm237, %v173, %v301
        %v366 = vsel %vm238, %v174, %v302
        %v367 = vsel %vm239, %v175, %v303
        %v368 = vsel %vm240, %v176, %v304
        %v369 = vsel %vm241, %v177, %v305
        %v370 = vsel %vm242, %v178, %v306
        %v371 = vsel %vm243, %v179, %v307
        %v372 = vsel %vm244, %v180, %v308
        %v373 = vsel %vm245, %v181, %v309
        %v374 = vsel %vm246, %v182, %v310
        %v375 = vsel %vm247, %v183, %v311
        %v376 = vsel %vm248, %v184, %v312
        %v377 = vsel %vm249, %v185, %v313
        %v378 = vsel %vm250, %v186, %v314
        %v379 = vsel %vm251, %v187, %v315
        %v380 = vsel %vm252, %v188, %v316
        %v381 = vsel %vm253, %v189, %v317
        %v382 = vsel %vm254, %v190, %v318
        %v383 = vsel %vm255, %v191, %v319
        %v384 = vsel %vm256, %v192, %v320
        %v385 = vsel %vm257, %v193, %v321
        %v386 = vsel %vm258, %v194, %v322
        %v387 = vsel %vm259, %v195, %v323
        %v388 = vsel %vm260, %v196, %v324
        %v389 = vsel %vm261, %v197, %v325
        %v390 = vsel %vm262, %v198, %v326
        %v391 = vsel %vm263, %v199, %v327
        %v392 = vsel %vm264, %v200, %v328
        %v393 = vsub.f32 %v329, 0.4
        %v394 = vsub.f32 %v330, 0.4
        %v395 = vsub.f32 %v331, 0.4
        %v396 = vsub.f32 %v332, 0.4
        %v397 = vsub.f32 %v333, 0.4
        %v398 = vsub.f32 %v334, 0.4
        %v399 = vsub.f32 %v335, 0.4
        %v400 = vsub.f32 %v336, 0.4
        %v401 = vsub.f32 %v337, 0.4
        %v402 = vsub.f32 %v338, 0.4
        %v403 = vsub.f32 %v339, 0.4
        %v404 = vsub.f32 %v340, 0.4
        %v405 = vsub.f32 %v341, 0.4
        %v406 = vsub.f32 %v342, 0.4
        %v407 = vsub.f32 %v343, 0.4
        %v408 = vsub.f32 %v344, 0.4
        %v409 = vsub.f32 %v345, 0.4
        %v410 = vsub.f32 %v346, 0.4
        %v411 = vsub.f32 %v347, 0.4
        %v412 = vsub.f32 %v348, 0.4
        %v413 = vsub.f32 %v349, 0.4
        %v414 = vsub.f32 %v350, 0.4
        %v415 = vsub.f32 %v351, 0.4
        %v416 = vsub.f32 %v352, 0.4
        %v417 = vsub.f32 %v353, 0.4
        %v418 = vsub.f32 %v354, 0.4
        %v419 = vsub.f32 %v355, 0.4
        %v420 = vsub.f32 %v356, 0.4
        %v421 = vsub.f32 %v357, 0.4
        %v422 = vsub.f32 %v358, 0.4
        %v423 = vsub.f32 %v359, 0.4
        %v424 = vsub.f32 %v360, 0.4
        %v425 = vsub.f32 %v361, 0.4
        %v426 = vsub.f32 %v362, 0.4
        %v427 = vsub.f32 %v363, 0.4
        %v428 = vsub.f32 %v364, 0.4
        %v429 = vsub.f32 %v365, 0.4
        %v430 = vsub.f32 %v366, 0.4
        %v431 = vsub.f32 %v367, 0.4
        %v432 = vsub.f32 %v368, 0.4
        %v433 = vsub.f32 %v369, 0.4
        %v434 = vsub.f32 %v370, 0.4
        %v435 = vsub.f32 %v371, 0.4
        %v436 = vsub.f32 %v372, 0.4
        %v437 = vsub.f32 %v373, 0.4
        %v438 = vsub.f32 %v374, 0.4
        %v439 = vsub.f32 %v375, 0.4
        %v440 = vsub.f32 %v376, 0.4
        %v441 = vsub.f32 %v377, 0.4
        %v442 = vsub.f32 %v378, 0.4
        %v443 = vsub.f32 %v379, 0.4
        %v444 = vsub.f32 %v380, 0.4
        %v445 = vsub.f32 %v381, 0.4
        %v446 = vsub.f32 %v382, 0.4
        %v447 = vsub.f32 %v383, 0.4
        %v448 = vsub.f32 %v384, 0.4
        %v449 = vsub.f32 %v385, 0.4
        %v450 = vsub.f32 %v386, 0.4
        %v451 = vsub.f32 %v387, 0.4
        %v452 = vsub.f32 %v388, 0.4
        %v453 = vsub.f32 %v389, 0.4
        %v454 = vsub.f32 %v390, 0.4
        %v455 = vsub.f32 %v391, 0.4
        %v456 = vsub.f32 %v392, 0.4
        %v457 = vmin.f32 %v393, 2.0
        %v458 = vmin.f32 %v394, 2.0
        %v459 = vmin.f32 %v395, 2.0
        %v460 = vmin.f32 %v396, 2.0
        %v461 = vmin.f32 %v397, 2.0
        %v462 = vmin.f32 %v398, 2.0
        %v463 = vmin.f32 %v399, 2.0
        %v464 = vmin.f32 %v400, 2.0
        %v465 = vmin.f32 %v401, 2.0
        %v466 = vmin.f32 %v402, 2.0
        %v467 = vmin.f32 %v403, 2.0
        %v468 = vmin.f32 %v404, 2.0
        %v469 = vmin.f32 %v405, 2.0
        %v470 = vmin.f32 %v406, 2.0
        %v471 = vmin.f32 %v407, 2.0
        %v472 = vmin.f32 %v408, 2.0
        %v473 = vmin.f32 %v409, 2.0
        %v474 = vmin.f32 %v410, 2.0
        %v475 = vmin.f32 %v411, 2.0
        %v476 = vmin.f32 %v412, 2.0
        %v477 = vmin.f32 %v413, 2.0
        %v478 = vmin.f32 %v414, 2.0
        %v479 = vmin.f32 %v415, 2.0
        %v480 = vmin.f32 %v416, 2.0
        %v481 = vmin.f32 %v417, 2.0
        %v482 = vmin.f32 %v418, 2.0
        %v483 = vmin.f32 %v419, 2.0
        %v484 = vmin.f32 %v420, 2.0
        %v485 = vmin.f32 %v421, 2.0
        %v486 = vmin.f32 %v422, 2.0
        %v487 = vmin.f32 %v423, 2.0
        %v488 = vmin.f32 %v424, 2.0
        %v489 = vmin.f32 %v425, 2.0
        %v490 = vmin.f32 %v426, 2.0
        %v491 = vmin.f32 %v427, 2.0
        %v492 = vmin.f32 %v428, 2.0
        %v493 = vmin.f32 %v429, 2.0
        %v494 = vmin.f32 %v430, 2.0
        %v495 = vmin.f32 %v431, 2.0
        %v496 = vmin.f32 %v432, 2.0
        %v497 = vmin.f32 %v433, 2.0
        %v498 = vmin.f32 %v434, 2.0
        %v499 = vmin.f32 %v435, 2.0
        %v500 = vmin.f32 %v436, 2.0
        %v501 = vmin.f32 %v437, 2.0
        %v502 = vmin.f32 %v438, 2.0
        %v503 = vmin.f32 %v439, 2.0
        %v504 = vmin.f32 %v440, 2.0
        %v505 = vmin.f32 %v441, 2.0
        %v506 = vmin.f32 %v442, 2.0
        %v507 = vmin.f32 %v443, 2.0
        %v508 = vmin.f32 %v444, 2.0
        %v509 = vmin.f32 %v445, 2.0
        %v510 = vmin.f32 %v446, 2.0
        %v511 = vmin.f32 %v447, 2.0
        %v512 = vmin.f32 %v448, 2.0
        %v513 = vmin.f32 %v449, 2.0
        %v514 = vmin.f32 %v450, 2.0
        %v515 = vmin.f32 %v451, 2.0
        %v516 = vmin.f32 %v452, 2.0
        %v517 = vmin.f32 %v453, 2.0
        %v518 = vmin.f32 %v454, 2.0
        %v519 = vmin.f32 %v455, 2.0
        %v520 = vmin.f32 %v456, 2.0
        %521 = vst [vmem:[%s134] sm:$0xff] %v457
        %522 = vst [vmem:[%s134 + $0x8] sm:$0xff] %v458
        %523 = vst [vmem:[%s134 + $0x10] sm:$0xff] %v459
        %524 = vst [vmem:[%s134 + $0x18] sm:$0xff] %v460
        %525 = vst [vmem:[%s134 + $0x20] sm:$0xff] %v461
        %526 = vst [vmem:[%s134 + $0x28] sm:$0xff] %v462
        %527 = vst [vmem:[%s134 + $0x30] sm:$0xff] %v463
        %528 = vst [vmem:[%s134 + $0x38] sm:$0xff] %v464
        %529 = vst [vmem:[%s134 + $0x40] sm:$0xff] %v465
        %530 = vst [vmem:[%s134 + $0x48] sm:$0xff] %v466
        %531 = vst [vmem:[%s134 + $0x50] sm:$0xff] %v467
        %532 = vst [vmem:[%s134 + $0x58] sm:$0xff] %v468
        %533 = vst [vmem:[%s134 + $0x60] sm:$0xff] %v469
        %534 = vst [vmem:[%s134 + $0x68] sm:$0xff] %v470
        %535 = vst [vmem:[%s134 + $0x70] sm:$0xff] %v471
        %536 = vst [vmem:[%s134 + $0x78] sm:$0xff] %v472
        %537 = vst [vmem:[%s134 + $0x80] sm:$0xff] %v473
        %538 = vst [vmem:[%s134 + $0x88] sm:$0xff] %v474
        %539 = vst [vmem:[%s134 + $0x90] sm:$0xff] %v475
        %540 = vst [vmem:[%s134 + $0x98] sm:$0xff] %v476
        %541 = vst [vmem:[%s134 + $0xa0] sm:$0xff] %v477
        %542 = vst [vmem:[%s134 + $0xa8] sm:$0xff] %v478
        %543 = vst [vmem:[%s134 + $0xb0] sm:$0xff] %v479
        %544 = vst [vmem:[%s134 + $0xb8] sm:$0xff] %v480
        %545 = vst [vmem:[%s134 + $0xc0] sm:$0xff] %v481
        %546 = vst [vmem:[%s134 + $0xc8] sm:$0xff] %v482
        %547 = vst [vmem:[%s134 + $0xd0] sm:$0xff] %v483
        %548 = vst [vmem:[%s134 + $0xd8] sm:$0xff] %v484
        %549 = vst [vmem:[%s134 + $0xe0] sm:$0xff] %v485
        %550 = vst [vmem:[%s134 + $0xe8] sm:$0xff] %v486
        %551 = vst [vmem:[%s134 + $0xf0] sm:$0xff] %v487
        %552 = vst [vmem:[%s134 + $0xf8] sm:$0xff] %v488
        %553 = vst [vmem:[%s134 + $0x100] sm:$0xff] %v489
        %554 = vst [vmem:[%s134 + $0x108] sm:$0xff] %v490
        %555 = vst [vmem:[%s134 + $0x110] sm:$0xff] %v491
        %556 = vst [vmem:[%s134 + $0x118] sm:$0xff] %v492
        %557 = vst [vmem:[%s134 + $0x120] sm:$0xff] %v493
        %558 = vst [vmem:[%s134 + $0x128] sm:$0xff] %v494
        %559 = vst [vmem:[%s134 + $0x130] sm:$0xff] %v495
        %560 = vst [vmem:[%s134 + $0x138] sm:$0xff] %v496
        %561 = vst [vmem:[%s134 + $0x140] sm:$0xff] %v497
        %562 = vst [vmem:[%s134 + $0x148] sm:$0xff] %v498
        %563 = vst [vmem:[%s134 + $0x150] sm:$0xff] %v499
        %564 = vst [vmem:[%s134 + $0x158] sm:$0xff] %v500
        %565 = vst [vmem:[%s134 + $0x160] sm:$0xff] %v501
        %566 = vst [vmem:[%s134 + $0x168] sm:$0xff] %v502
        %567 = vst [vmem:[%s134 + $0x170] sm:$0xff] %v503
        %568 = vst [vmem:[%s134 + $0x178] sm:$0xff] %v504
        %569 = vst [vmem:[%s134 + $0x180] sm:$0xff] %v505
        %570 = vst [vmem:[%s134 + $0x188] sm:$0xff] %v506
        %571 = vst [vmem:[%s134 + $0x190] sm:$0xff] %v507
        %572 = vst [vmem:[%s134 + $0x198] sm:$0xff] %v508
        %573 = vst [vmem:[%s134 + $0x1a0] sm:$0xff] %v509
        %574 = vst [vmem:[%s134 + $0x1a8] sm:$0xff] %v510
        %575 = vst [vmem:[%s134 + $0x1b0] sm:$0xff] %v511
        %576 = vst [vmem:[%s134 + $0x1b8] sm:$0xff] %v512
        %577 = vst [vmem:[%s134 + $0x1c0] sm:$0xff] %v513
        %578 = vst [vmem:[%s134 + $0x1c8] sm:$0xff] %v514
        %579 = vst [vmem:[%s134 + $0x1d0] sm:$0xff] %v515
        %580 = vst [vmem:[%s134 + $0x1d8] sm:$0xff] %v516
        %581 = vst [vmem:[%s134 + $0x1e0] sm:$0xff] %v517
        %582 = vst [vmem:[%s134 + $0x1e8] sm:$0xff] %v518
        %583 = vst [vmem:[%s134 + $0x1f0] sm:$0xff] %v519
        %584 = vst [vmem:[%s134 + $0x1f8] sm:$0xff] %v520
        %s585 = sand.u32 %s52, 1
        %s586 = scalar_lea.sflag [#allocation4], %s585
        %s587 = sand.u32 %s52, 1
        %s588 = smul.addr %s587, 512
        %s589 = scalar_lea.vmem [#allocation5], %s588
        // Predicated region
        $region29: #{tpu_custom_call.1} parent=23 // pred_check
          %p590 = pneg %p62
        $region30: #{tpu_custom_call.1} parent=23 // pred_check_branch
          %592 = sbr.rel (%p590) target = $region32
        $region31: #{tpu_custom_call.1} parent=23 // pred_region
          %s593 = smul.u32 64, %s18
          %s595 = ssub.s32 8192, 8192
          %596 = vsyncadd %s586, %s595
          %s597 = smul.addr %s593, 128
          %s598 = scalar_lea.hbm %s1, %s597
          %s599 = sshll.u32 %s589, 4
          %s600 = int_to_ptr.vmem [resolvable:$true] %s599
          %605 = dma.vmem_to_hbm [thread:$0]  %s600, 8192, %s598, %s586, 128, 128, 8
        $region32: #{tpu_custom_call.1} parent=23 // pred_fallthru
          _
      $region24: #{tpu_custom_call.1} parent=5 // pred_fallthru
        _
      %p606 = scmp.le.s32.totalorder 2, %s13
      // Predicated region
      $region33: #{tpu_custom_call.1} parent=5 // pred_check
        %p607 = pneg %p606
      $region34: #{tpu_custom_call.1} parent=5 // pred_check_branch
        %609 = sbr.rel (%p607) target = $region36
      $region35: #{tpu_custom_call.1} parent=5 // pred_region
        %s610 = ssub.s32 %s13, 2
        // Predicated region
        $region37: #{tpu_custom_call.1} parent=35 // pred_check
          %p611 = pneg %p68
        $region38: #{tpu_custom_call.1} parent=35 // pred_check_branch
          %613 = sbr.rel (%p611) target = $region40
        $region39: #{tpu_custom_call.1} parent=35 // pred_region
          %s614 = sand.u32 %s53, 1
          %s615 = scalar_lea.sflag [#allocation4], %s614
          %s616 = sand.u32 %s53, 1
          %s617 = smul.addr %s616, 512
          %s618 = scalar_lea.vmem [#allocation5], %s617
          %619 = dma.done %s615, 8192
        $region40: #{tpu_custom_call.1} parent=35 // pred_fallthru
          _
      $region36: #{tpu_custom_call.1} parent=5 // pred_fallthru
        _
    $region6: #{tpu_custom_call.1} parent=1 // loop_footer
      %s17 = sadd.s32 1, %s13
    $region7: #{tpu_custom_call.1} parent=1 // loop_footer_branch
      %12 = sbr.rel target = $region3
    $region8: #{tpu_custom_call.1} parent=1 // loop_exit
      _
    %620 = vsyncpa [#allocation3], 1
    %s621 = scalar_lea.sflag [#allocation3], 1
    %622 = vsyncpa %s621, 1
    %623 = vsyncpa [#allocation4], 1
    %s624 = scalar_lea.sflag [#allocation4], 1
    %625 = vsyncpa %s624, 1

</llo_original>
